<compile_context>
chip_gen: v7x
topology: tpu7x:2x2x1
jax: 0.10.0
libtpu: 0.0.40
codegen_flags: <defaults>
</compile_context>

<pallas_src>
import jax
import jax.numpy as jnp
from jax.experimental import pallas as pl
from jax.experimental.pallas import tpu as pltpu

BN_EPS = 1e-5


def _round_up(x, m):
    return ((x + m - 1) // m) * m


def gnn_block_kernel(a_ref, x_ref, scale_ref, shift_ref, w_ref, b_ref,
                     o_ref, acc_ref):
    """One (row-tile i, reduction-tile k) step of out = (A @ relu(x*s+t)) @ W + b.

    a_ref:     [tm, tk]     bf16 tile of the normalized adjacency
    x_ref:     [tk, Cin]    f32 node-feature tile (reduction rows)
    scale_ref: [1, Cin]     folded BN scale = gamma * rsqrt(var + eps)
    shift_ref: [1, Cin]     folded BN shift = beta - mean * scale
    w_ref:     [Cin, Cout]  GCN linear weight (padded)
    b_ref:     [1, Cout]    GCN bias (padded)
    o_ref:     [tm, Cout]   output tile
    acc_ref:   [tm, Cin]    f32 VMEM accumulator for A @ h
    """
    k = pl.program_id(1)

    @pl.when(k == 0)
    def _():
        acc_ref[...] = jnp.zeros_like(acc_ref)

    # BatchNorm1d (eval mode, folded into one FMA) + ReLU on this k-tile.
    # F.dropout(p, training=False) is the identity.
    # TODO(synk): training-mode stochastic dropout mask not implemented
    # (would use pltpu.prng_seed / pltpu.prng_random_bits before the matmul).
    h = jnp.maximum(
        x_ref[...].astype(jnp.float32) * scale_ref[...] + shift_ref[...], 0.0)

    # Aggregation first: acc += A_tile @ h  (bf16 MXU inputs, f32 accumulation).
    # With C_in < C_out this ordering halves the dominant N^2 contraction work.
    acc_ref[...] += jnp.dot(a_ref[...], h.astype(jnp.bfloat16),
                            preferred_element_type=jnp.float32)

    # Epilogue on the last reduction step: tiny (tm x Cin x Cout) matmul + bias.
    @pl.when(k == pl.num_programs(1) - 1)
    def _():
        out = jnp.dot(acc_ref[...], w_ref[...],
                      preferred_element_type=jnp.float32) + b_ref[...]
        o_ref[...] = out.astype(o_ref.dtype)


def gcn_normalized_adjacency(edge_index, num_nodes):
    """Dense GCN normalization: D^{-1/2} (A + I) D^{-1/2}  (plain-JAX glue).

    TODO(synk): for realistic graphs replace the dense N x N adjacency with a
    block-sparse aggregation driven by PrefetchScalarGridSpec indices (O(E)).
    """
    src = edge_index[0]
    dst = edge_index[1]
    a = jnp.zeros((num_nodes, num_nodes), jnp.float32)
    a = a.at[dst, src].add(1.0)                              # message j -> i
    a = a + jnp.eye(num_nodes, dtype=jnp.float32)            # add_self_loops
    deg = jnp.sum(a, axis=1)
    dinv = jnp.where(deg > 0, 1.0 / jnp.sqrt(deg), 0.0)
    return dinv[:, None] * a * dinv[None, :]


def gnn_block_forward(x, edge_index, params):
    n, c_in = x.shape
    w = params["weight"]                     # [Cin, Cout]
    c_out = w.shape[1]

    # Fold BatchNorm (eval mode, running stats) into a single scale/shift FMA.
    scale = params["gamma"] * jax.lax.rsqrt(params["running_var"] + BN_EPS)
    shift = params["beta"] - params["running_mean"] * scale

    # Lane-friendly padding: channels -> multiples of 128 (unmasked vst),
    # nodes -> multiple of 128 so row/reduction tiles divide evenly.
    cin_p = _round_up(c_in, 128)
    cout_p = _round_up(c_out, 128)
    n_p = _round_up(n, 128)

    # Power-of-two tiles that divide n_p; sized so double-buffered A tiles +
    # x tiles + accumulator stay a few MiB (fits v7x's 32 MiB scoped VMEM).
    tm = next(t for t in (256, 128) if n_p % t == 0)
    tk = next(t for t in (1024, 512, 256, 128) if n_p % t == 0)

    a_norm = gcn_normalized_adjacency(edge_index, n)

    a_p = jnp.zeros((n_p, n_p), jnp.float32).at[:n, :n].set(a_norm)
    a_p = a_p.astype(jnp.bfloat16)           # HBM-bound operand -> bf16
    x_p = jnp.zeros((n_p, cin_p), jnp.float32).at[:n, :c_in].set(
        x.astype(jnp.float32))
    w_p = jnp.zeros((cin_p, cout_p), jnp.float32).at[:c_in, :c_out].set(w)
    b_p = jnp.zeros((1, cout_p), jnp.float32).at[0, :c_out].set(params["bias"])
    scale_p = jnp.zeros((1, cin_p), jnp.float32).at[0, :c_in].set(scale)
    shift_p = jnp.zeros((1, cin_p), jnp.float32).at[0, :c_in].set(shift)

    grid = (n_p // tm, n_p // tk)

    # Rough VMEM budget: double-buffered A/x/out tiles + accumulator + params.
    vmem_bytes = (2 * tm * tk * 2            # A tiles (bf16)
                  + 2 * tk * cin_p * 4       # x tiles
                  + 2 * tm * cout_p * 4      # out tiles
                  + tm * cin_p * 4           # accumulator
                  + 2 * (cin_p * cout_p * 4 + 2 * cin_p * 4 + cout_p * 4))
    vmem_limit = int(min(64 * 2**20, max(2 * vmem_bytes, 8 * 2**20)))

    flops = 2 * n_p * n_p * cin_p + 2 * n_p * cin_p * cout_p
    bytes_accessed = (n_p * n_p * 2 + n_p * cin_p * 4 + n_p * cout_p * 4
                      + cin_p * cout_p * 4)

    out_p = pl.pallas_call(
        gnn_block_kernel,
        out_shape=jax.ShapeDtypeStruct((n_p, cout_p), x.dtype),
        grid_spec=pltpu.PrefetchScalarGridSpec(
            num_scalar_prefetch=0,
            grid=grid,
            in_specs=[
                pl.BlockSpec((tm, tk), lambda i, k: (i, k)),         # A tile
                pl.BlockSpec((tk, cin_p), lambda i, k: (k, 0)),      # x tile
                pl.BlockSpec((1, cin_p), lambda i, k: (0, 0)),       # scale
                pl.BlockSpec((1, cin_p), lambda i, k: (0, 0)),       # shift
                pl.BlockSpec((cin_p, cout_p), lambda i, k: (0, 0)),  # W
                pl.BlockSpec((1, cout_p), lambda i, k: (0, 0)),      # b
            ],
            out_specs=pl.BlockSpec((tm, cout_p), lambda i, k: (i, 0)),
            scratch_shapes=[pltpu.VMEM((tm, cin_p), jnp.float32)],
        ),
        compiler_params=pltpu.CompilerParams(
            dimension_semantics=("parallel", "arbitrary"),
            vmem_limit_bytes=vmem_limit),
        cost_estimate=pl.CostEstimate(
            flops=flops, transcendentals=0, bytes_accessed=bytes_accessed),
    )(a_p, x_p, scale_p, shift_p, w_p, b_p)

    return out_p[:n, :c_out]


def reference_forward(x, edge_index, params):
    """Pure-JAX f32 reference for correctness checking."""
    n, _ = x.shape
    h = ((x - params["running_mean"]) / jnp.sqrt(params["running_var"] + BN_EPS)
         * params["gamma"] + params["beta"])
    h = jnp.maximum(h, 0.0)
    a_norm = gcn_normalized_adjacency(edge_index, n)
    return a_norm @ (h @ params["weight"]) + params["bias"]


if __name__ == "__main__":
    N, C_IN, C_OUT, E = 64, 32, 64, 256

    key = jax.random.PRNGKey(0)
    k_x, k_src, k_dst, k_w = jax.random.split(key, 4)

    x = jax.random.normal(k_x, (N, C_IN), dtype=jnp.float32)
    edge_index = jnp.stack(
        [jax.random.randint(k_src, (E,), 0, N),
         jax.random.randint(k_dst, (E,), 0, N)], axis=0).astype(jnp.int32)

    # Deterministic parameter init mirroring the PyTorch module:
    #   BatchNorm1d(C_IN): gamma=1, beta=0, running_mean=0, running_var=1
    #   GCNConv(C_IN, C_OUT): Glorot-style weight [C_IN, C_OUT], bias zeros
    glorot_scale = jnp.sqrt(6.0 / (C_IN + C_OUT))
    params = {
        "weight": jax.random.uniform(
            k_w, (C_IN, C_OUT), jnp.float32, -glorot_scale, glorot_scale),
        "bias": jnp.zeros((C_OUT,), jnp.float32),
        "gamma": jnp.ones((C_IN,), jnp.float32),
        "beta": jnp.zeros((C_IN,), jnp.float32),
        "running_mean": jnp.zeros((C_IN,), jnp.float32),
        "running_var": jnp.ones((C_IN,), jnp.float32),
    }

    out = gnn_block_forward(x, edge_index, params)
    out = jax.block_until_ready(out)

    ref = reference_forward(x, edge_index, params)
    assert out.shape == (N, C_OUT)
    assert bool(jnp.all(jnp.isfinite(out)))
    # bf16 storage of A_norm / bf16 MXU inputs (f32 accumulation) bound the
    # quantization error at ~1e-3; tolerance set accordingly vs f32 reference.
    assert jnp.allclose(out, ref, atol=2e-2, rtol=2e-2), "mismatch vs JAX reference"

    print("KERNEL_OK")
</pallas_src>

<mosaic_0001>
module attributes {stable_mosaic.version = 11 : i64} {
  func.func @gnn_block_kernel(%arg0: i32, %arg1: i32, %arg2: memref<128x128xbf16, #tpu.memory_space<vmem>>, %arg3: memref<128x128xf32, #tpu.memory_space<vmem>>, %arg4: memref<1x128xf32, #tpu.memory_space<vmem>>, %arg5: memref<1x128xf32, #tpu.memory_space<vmem>>, %arg6: memref<128x128xf32, #tpu.memory_space<vmem>>, %arg7: memref<1x128xf32, #tpu.memory_space<vmem>>, %arg8: memref<128x128xf32, #tpu.memory_space<vmem>>, %arg9: memref<128x128xf32, #tpu.memory_space<vmem>>) attributes {dimension_semantics = [#tpu.dimension_semantics<parallel>, #tpu.dimension_semantics<arbitrary>], iteration_bounds = array<i64: 1, 1>, scalar_prefetch = 0 : i64, scratch_operands = 1 : i64, tpu.core_type = #tpu.core_type<tc>, window_params = [{transform_indices = @transform_0, window_bounds = array<i64: 128, 128>}, {transform_indices = @transform_1, window_bounds = array<i64: 128, 128>}, {pipeline_mode = #tpu.pipeline_mode<synchronous>, transform_indices = @transform_2, window_bounds = array<i64: 1, 128>}, {pipeline_mode = #tpu.pipeline_mode<synchronous>, transform_indices = @transform_3, window_bounds = array<i64: 1, 128>}, {pipeline_mode = #tpu.pipeline_mode<synchronous>, transform_indices = @transform_4, window_bounds = array<i64: 128, 128>}, {pipeline_mode = #tpu.pipeline_mode<synchronous>, transform_indices = @transform_5, window_bounds = array<i64: 1, 128>}, {transform_indices = @transform_6, window_bounds = array<i64: 128, 128>}]} {
    %c0_i32 = arith.constant 0 : i32
    %0 = arith.cmpi eq, %arg1, %c0_i32 : i32
    %1 = arith.extui %0 : i1 to i32
    %c0_i32_0 = arith.constant 0 : i32
    %2 = arith.cmpi ne, %1, %c0_i32_0 : i32
    scf.if %2 {
      %cst_15 = arith.constant 0.000000e+00 : f32
      %21 = vector.broadcast %cst_15 : f32 to vector<128x128xf32>
      %c0_16 = arith.constant 0 : index
      %c0_17 = arith.constant 0 : index
      %22 = vector.load %arg9[%c0_16, %c0_17] : memref<128x128xf32, #tpu.memory_space<vmem>>, vector<128x128xf32>
      tpu.vector_store %arg9[%c0_16, %c0_17], %21 {strides = array<i32>} : memref<128x128xf32, #tpu.memory_space<vmem>>, vector<128x128xf32>,
    } else {
    }
    %c0 = arith.constant 0 : index
    %c0_1 = arith.constant 0 : index
    %3 = vector.load %arg3[%c0, %c0_1] : memref<128x128xf32, #tpu.memory_space<vmem>>, vector<128x128xf32>
    %c0_2 = arith.constant 0 : index
    %c0_3 = arith.constant 0 : index
    %4 = vector.load %arg4[%c0_2, %c0_3] : memref<1x128xf32, #tpu.memory_space<vmem>>, vector<1x128xf32>
    %5 = vector.broadcast %4 : vector<1x128xf32> to vector<128x128xf32>
    %6 = arith.mulf %3, %5 : vector<128x128xf32>
    %c0_4 = arith.constant 0 : index
    %c0_5 = arith.constant 0 : index
    %7 = vector.load %arg5[%c0_4, %c0_5] : memref<1x128xf32, #tpu.memory_space<vmem>>, vector<1x128xf32>
    %8 = vector.broadcast %7 : vector<1x128xf32> to vector<128x128xf32>
    %9 = arith.addf %6, %8 : vector<128x128xf32>
    %cst = arith.constant 0.000000e+00 : f32
    %10 = vector.broadcast %cst : f32 to vector<128x128xf32>
    %11 = arith.maximumf %9, %10 : vector<128x128xf32>
    %c0_6 = arith.constant 0 : index
    %c0_7 = arith.constant 0 : index
    %12 = vector.load %arg9[%c0_6, %c0_7] : memref<128x128xf32, #tpu.memory_space<vmem>>, vector<128x128xf32>
    %c0_8 = arith.constant 0 : index
    %c0_9 = arith.constant 0 : index
    %13 = vector.load %arg2[%c0_8, %c0_9] : memref<128x128xbf16, #tpu.memory_space<vmem>>, vector<128x128xbf16>
    %14 = arith.truncf %11 : vector<128x128xf32> to vector<128x128xbf16>
    %cst_10 = arith.constant dense<0.000000e+00> : vector<128x128xf32>
    %15 = tpu.matmul %13, %14, %cst_10 {dimension_numbers = #tpu.dot_dimension_numbers<[1], [0], [0], [1], [0, 0, 1, 1], [], []>} : vector<128x128xbf16>, vector<128x128xbf16>, vector<128x128xf32> -> vector<128x128xf32>
    %16 = arith.addf %12, %15 : vector<128x128xf32>
    %c0_11 = arith.constant 0 : index
    %c0_12 = arith.constant 0 : index
    %17 = vector.load %arg9[%c0_11, %c0_12] : memref<128x128xf32, #tpu.memory_space<vmem>>, vector<128x128xf32>
    tpu.vector_store %arg9[%c0_11, %c0_12], %16 {strides = array<i32>} : memref<128x128xf32, #tpu.memory_space<vmem>>, vector<128x128xf32>,
    %c0_i32_13 = arith.constant 0 : i32
    %18 = arith.cmpi eq, %arg1, %c0_i32_13 : i32
    %19 = arith.extui %18 : i1 to i32
    %c0_i32_14 = arith.constant 0 : i32
    %20 = arith.cmpi ne, %19, %c0_i32_14 : i32
    scf.if %20 {
      %c0_15 = arith.constant 0 : index
      %c0_16 = arith.constant 0 : index
      %21 = vector.load %arg9[%c0_15, %c0_16] : memref<128x128xf32, #tpu.memory_space<vmem>>, vector<128x128xf32>
      %c0_17 = arith.constant 0 : index
      %c0_18 = arith.constant 0 : index
      %22 = vector.load %arg6[%c0_17, %c0_18] : memref<128x128xf32, #tpu.memory_space<vmem>>, vector<128x128xf32>
      %cst_19 = arith.constant dense<0.000000e+00> : vector<128x128xf32>
      %23 = tpu.matmul %21, %22, %cst_19 {dimension_numbers = #tpu.dot_dimension_numbers<[1], [0], [0], [1], [0, 0, 1, 1], [], []>} : vector<128x128xf32>, vector<128x128xf32>, vector<128x128xf32> -> vector<128x128xf32>
      %c0_20 = arith.constant 0 : index
      %c0_21 = arith.constant 0 : index
      %24 = vector.load %arg7[%c0_20, %c0_21] : memref<1x128xf32, #tpu.memory_space<vmem>>, vector<1x128xf32>
      %25 = vector.broadcast %24 : vector<1x128xf32> to vector<128x128xf32>
      %26 = arith.addf %23, %25 : vector<128x128xf32>
      %c0_22 = arith.constant 0 : index
      %c0_23 = arith.constant 0 : index
      %27 = vector.load %arg8[%c0_22, %c0_23] : memref<128x128xf32, #tpu.memory_space<vmem>>, vector<128x128xf32>
      tpu.vector_store %arg8[%c0_22, %c0_23], %26 {strides = array<i32>} : memref<128x128xf32, #tpu.memory_space<vmem>>, vector<128x128xf32>,
    } else {
    }
    return
  }
  func.func @transform_0(%arg0: i32, %arg1: i32) -> (i32, i32) {
    %c0_i32 = arith.constant 0 : i32
    return %arg0, %arg1 : i32, i32
  }
  func.func @transform_1(%arg0: i32, %arg1: i32) -> (i32, i32) {
    %c0_i32 = arith.constant 0 : i32
    %c0_i32_0 = arith.constant 0 : i32
    return %arg1, %c0_i32 : i32, i32
  }
  func.func @transform_2(%arg0: i32, %arg1: i32) -> (i32, i32) {
    %c0_i32 = arith.constant 0 : i32
    %c0_i32_0 = arith.constant 0 : i32
    %c0_i32_1 = arith.constant 0 : i32
    return %c0_i32, %c0_i32_0 : i32, i32
  }
  func.func @transform_3(%arg0: i32, %arg1: i32) -> (i32, i32) {
    %c0_i32 = arith.constant 0 : i32
    %c0_i32_0 = arith.constant 0 : i32
    %c0_i32_1 = arith.constant 0 : i32
    return %c0_i32, %c0_i32_0 : i32, i32
  }
  func.func @transform_4(%arg0: i32, %arg1: i32) -> (i32, i32) {
    %c0_i32 = arith.constant 0 : i32
    %c0_i32_0 = arith.constant 0 : i32
    %c0_i32_1 = arith.constant 0 : i32
    return %c0_i32, %c0_i32_0 : i32, i32
  }
  func.func @transform_5(%arg0: i32, %arg1: i32) -> (i32, i32) {
    %c0_i32 = arith.constant 0 : i32
    %c0_i32_0 = arith.constant 0 : i32
    %c0_i32_1 = arith.constant 0 : i32
    return %c0_i32, %c0_i32_0 : i32, i32
  }
  func.func @transform_6(%arg0: i32, %arg1: i32) -> (i32, i32) {
    %c0_i32 = arith.constant 0 : i32
    %c0_i32_0 = arith.constant 0 : i32
    return %arg0, %c0_i32 : i32, i32
  }
}

</mosaic_0001>

<llo_original>
// kernel: tpu_custom_call.1
$region0: #{tpu_custom_call.1}
  #allocation0 [shape = 'u32[]', space=smem, size = 0x4, offset = 0x4, fixed_abs, tag = 'smem constant byte address 0x4 - core index']
  #allocation1 [shape = 'u32[144,128]{1,0:T(1,128)}', space=vmem, size = 0x12000, scoped, tag = 'internal scratch']
  #allocation2 [shape = 'f32[128,128]{1,0:T(8,128)}', space=vmem, size = 0x10000, scoped, tag = 'scratch operand']
  %s0 = inlined_call_operand.hbm [shape: bf16[128,128], index: 0, kind: input, shape index: {}]
  %s1 = inlined_call_operand.hbm [shape: f32[128,128], index: 1, kind: input, shape index: {}]
  %s2 = inlined_call_operand.vmem [shape: f32[1,128], index: 2, kind: input, shape index: {}]
  %s3 = inlined_call_operand.vmem [shape: f32[1,128], index: 3, kind: input, shape index: {}]
  %s4 = inlined_call_operand.hbm [shape: f32[128,128], index: 4, kind: input, shape index: {}]
  %s5 = inlined_call_operand.vmem [shape: f32[1,128], index: 5, kind: input, shape index: {}]
  %s6 = inlined_call_operand.hbm [shape: f32[128,128], index: 6, kind: output, shape index: {}]
  %s7 = sld [smem:[#allocation0]]
  $region54: #{tpu_custom_call.1} parent=0
    _
  %s9 = ssub.s32 1, %s7
  %s10 = scalar_select 0, %s9, %s7
  $region1: #{tpu_custom_call.1} parent=0
    #allocation3 [shape = 'u8[32768]{0}', space=vmem, size = 0x8000, scoped, tag = 'input window, operand 0, single buffered']
    #allocation4 [shape = 's32[1]{0}', space=sflag, size = 0x4, scoped, tag = 'scoped memory for tpu_custom_call.1']
    #allocation5 [shape = 's32[1]{0}', space=sflag, size = 0x4, scoped, tag = 'scoped memory for tpu_custom_call.1']
    #allocation6 [shape = 'u8[65536]{0}', space=vmem, size = 0x10000, scoped, tag = 'input window, operand 1, single buffered']
    #allocation7 [shape = 's32[1]{0}', space=sflag, size = 0x4, scoped, tag = 'scoped memory for tpu_custom_call.1']
    #allocation8 [shape = 'u8[65536]{0}', space=vmem, size = 0x10000, scoped, tag = 'input window, operand 4, single buffered']
    #allocation9 [shape = 'u8[65536]{0}', space=vmem, size = 0x10000, scoped, tag = 'output window, operand 0, single buffered']
    %11 = vsyncpa [#allocation4], 0
    %12 = vsyncpa [#allocation7], 0
    %13 = vsyncpa [#allocation5], 0
    // Predicated region
    $region2: #{tpu_custom_call.1} parent=1 // pred_check
      _
    $region3: #{tpu_custom_call.1} parent=1 // pred_check_branch
      %15 = sbr.rel (0) target = $region5
    $region4: #{tpu_custom_call.1} parent=1 // pred_region
      %s17 = ssub.s32 1024, 1024
      %18 = vsyncadd [#allocation4], %s17
      %s19 = sshll.u32 [#allocation3], 4
      %s20 = int_to_ptr.vmem [resolvable:$true] %s19
      %25 = dma.hbm_to_vmem [thread:$0]  %s0, 1024, %s20, [#allocation4], 64, 64, 4
    $region5: #{tpu_custom_call.1} parent=1 // pred_fallthru
      _
    // Predicated region
    $region6: #{tpu_custom_call.1} parent=1 // pred_check
      _
    $region7: #{tpu_custom_call.1} parent=1 // pred_check_branch
      %27 = sbr.rel (0) target = $region9
    $region8: #{tpu_custom_call.1} parent=1 // pred_region
      %s29 = ssub.s32 2048, 2048
      %30 = vsyncadd [#allocation7], %s29
      %s31 = sshll.u32 [#allocation6], 4
      %s32 = int_to_ptr.vmem [resolvable:$true] %s31
      %37 = dma.hbm_to_vmem [thread:$0]  %s1, 2048, %s32, [#allocation7], 128, 128, 8
    $region9: #{tpu_custom_call.1} parent=1 // pred_fallthru
      _
    // Predicated region
    $region10: #{tpu_custom_call.1} parent=1 // pred_check
      _
    $region11: #{tpu_custom_call.1} parent=1 // pred_check_branch
      %39 = sbr.rel (0) target = $region13
    $region12: #{tpu_custom_call.1} parent=1 // pred_region
      _
    $region13: #{tpu_custom_call.1} parent=1 // pred_fallthru
      _
    // Predicated region
    $region14: #{tpu_custom_call.1} parent=1 // pred_check
      _
    $region15: #{tpu_custom_call.1} parent=1 // pred_check_branch
      %41 = sbr.rel (0) target = $region17
    $region16: #{tpu_custom_call.1} parent=1 // pred_region
      _
    $region17: #{tpu_custom_call.1} parent=1 // pred_fallthru
      _
    // Predicated region
    $region18: #{tpu_custom_call.1} parent=1 // pred_check
      _
    $region19: #{tpu_custom_call.1} parent=1 // pred_check_branch
      %43 = sbr.rel (0) target = $region21
    $region20: #{tpu_custom_call.1} parent=1 // pred_region
      %s45 = ssub.s32 2048, 2048
      %46 = vsyncadd [#allocation7], %s45
      %s47 = sshll.u32 [#allocation8], 4
      %s48 = int_to_ptr.vmem [resolvable:$true] %s47
      %53 = dma.hbm_to_vmem [thread:$0]  %s4, 2048, %s48, [#allocation7], 128, 128, 8
    $region21: #{tpu_custom_call.1} parent=1 // pred_fallthru
      _
    // Predicated region
    $region22: #{tpu_custom_call.1} parent=1 // pred_check
      _
    $region23: #{tpu_custom_call.1} parent=1 // pred_check_branch
      %55 = sbr.rel (0) target = $region25
    $region24: #{tpu_custom_call.1} parent=1 // pred_region
      _
    $region25: #{tpu_custom_call.1} parent=1 // pred_fallthru
      _
    // Predicated region
    $region26: #{tpu_custom_call.1} parent=1 // pred_check
      _
    $region27: #{tpu_custom_call.1} parent=1 // pred_check_branch
      %57 = sbr.rel (0) target = $region29
    $region28: #{tpu_custom_call.1} parent=1 // pred_region
      %58 = dma.done [#allocation4], 1024
    $region29: #{tpu_custom_call.1} parent=1 // pred_fallthru
      _
    // Predicated region
    $region30: #{tpu_custom_call.1} parent=1 // pred_check
      _
    $region31: #{tpu_custom_call.1} parent=1 // pred_check_branch
      %60 = sbr.rel (0) target = $region33
    $region32: #{tpu_custom_call.1} parent=1 // pred_region
      %61 = dma.done [#allocation7], 2048
    $region33: #{tpu_custom_call.1} parent=1 // pred_fallthru
      _
    // Predicated region
    $region34: #{tpu_custom_call.1} parent=1 // pred_check
      _
    $region35: #{tpu_custom_call.1} parent=1 // pred_check_branch
      %63 = sbr.rel (0) target = $region37
    $region36: #{tpu_custom_call.1} parent=1 // pred_region
      %64 = dma.done [#allocation7], 2048
    $region37: #{tpu_custom_call.1} parent=1 // pred_fallthru
      _
    %p66 = scmp.eq.s32.totalorder 0, 0
    // Predicated region
    $region38: #{tpu_custom_call.1} parent=1 // pred_check
      %p67 = pneg %p66
    $region39: #{tpu_custom_call.1} parent=1 // pred_check_branch
      %69 = sbr.rel (%p67) target = $region41
    $region40: #{tpu_custom_call.1} parent=1 // pred_region
      %70 = vst [vmem:[#allocation2] sm:$0xff] 0.0
      %71 = vst [vmem:[#allocation2 + $0x8] sm:$0xff] 0.0
      %72 = vst [vmem:[#allocation2 + $0x10] sm:$0xff] 0.0
      %73 = vst [vmem:[#allocation2 + $0x18] sm:$0xff] 0.0
      %74 = vst [vmem:[#allocation2 + $0x20] sm:$0xff] 0.0
      %75 = vst [vmem:[#allocation2 + $0x28] sm:$0xff] 0.0
      %76 = vst [vmem:[#allocation2 + $0x30] sm:$0xff] 0.0
      %77 = vst [vmem:[#allocation2 + $0x38] sm:$0xff] 0.0
      %78 = vst [vmem:[#allocation2 + $0x40] sm:$0xff] 0.0
      %79 = vst [vmem:[#allocation2 + $0x48] sm:$0xff] 0.0
      %80 = vst [vmem:[#allocation2 + $0x50] sm:$0xff] 0.0
      %81 = vst [vmem:[#allocation2 + $0x58] sm:$0xff] 0.0
      %82 = vst [vmem:[#allocation2 + $0x60] sm:$0xff] 0.0
      %83 = vst [vmem:[#allocation2 + $0x68] sm:$0xff] 0.0
      %84 = vst [vmem:[#allocation2 + $0x70] sm:$0xff] 0.0
      %85 = vst [vmem:[#allocation2 + $0x78] sm:$0xff] 0.0
    $region41: #{tpu_custom_call.1} parent=1 // pred_fallthru
      _
    %v86 = vld [vmem:[#allocation6] sm:$0xff]
    %v87 = vld [vmem:[#allocation6 + $0x8] sm:$0xff]
    %v88 = vld [vmem:[#allocation6 + $0x10] sm:$0xff]
    %v89 = vld [vmem:[#allocation6 + $0x18] sm:$0xff]
    %v90 = vld [vmem:[#allocation6 + $0x20] sm:$0xff]
    %v91 = vld [vmem:[#allocation6 + $0x28] sm:$0xff]
    %v92 = vld [vmem:[#allocation6 + $0x30] sm:$0xff]
    %v93 = vld [vmem:[#allocation6 + $0x38] sm:$0xff]
    %v94 = vld [vmem:[#allocation6 + $0x40] sm:$0xff]
    %v95 = vld [vmem:[#allocation6 + $0x48] sm:$0xff]
    %v96 = vld [vmem:[#allocation6 + $0x50] sm:$0xff]
    %v97 = vld [vmem:[#allocation6 + $0x58] sm:$0xff]
    %v98 = vld [vmem:[#allocation6 + $0x60] sm:$0xff]
    %v99 = vld [vmem:[#allocation6 + $0x68] sm:$0xff]
    %v100 = vld [vmem:[#allocation6 + $0x70] sm:$0xff]
    %v101 = vld [vmem:[#allocation6 + $0x78] sm:$0xff]
    %v102 = vld [vmem:[%s2] sm:$0x1]
    %v104 = vlaneseq
    %v105 = vshrl.u32 %v104, 7
    %v106 = vsub.s32 0, %v105
    %v107 = vrot.slane %v102, %v106
    %v109 = vmul.f32 %v86, %v107
    %v110 = vmul.f32 %v87, %v107
    %v111 = vmul.f32 %v88, %v107
    %v112 = vmul.f32 %v89, %v107
    %v113 = vmul.f32 %v90, %v107
    %v114 = vmul.f32 %v91, %v107
    %v115 = vmul.f32 %v92, %v107
    %v116 = vmul.f32 %v93, %v107
    %v117 = vmul.f32 %v94, %v107
    %v118 = vmul.f32 %v95, %v107
    %v119 = vmul.f32 %v96, %v107
    %v120 = vmul.f32 %v97, %v107
    %v121 = vmul.f32 %v98, %v107
    %v122 = vmul.f32 %v99, %v107
    %v123 = vmul.f32 %v100, %v107
    %v124 = vmul.f32 %v101, %v107
    %v125 = vld [vmem:[%s3] sm:$0x1]
    %v127 = vlaneseq
    %v128 = vshrl.u32 %v127, 7
    %v129 = vsub.s32 0, %v128
    %v130 = vrot.slane %v125, %v129
    %v132 = vadd.f32 %v109, %v130
    %v133 = vadd.f32 %v110, %v130
    %v134 = vadd.f32 %v111, %v130
    %v135 = vadd.f32 %v112, %v130
    %v136 = vadd.f32 %v113, %v130
    %v137 = vadd.f32 %v114, %v130
    %v138 = vadd.f32 %v115, %v130
    %v139 = vadd.f32 %v116, %v130
    %v140 = vadd.f32 %v117, %v130
    %v141 = vadd.f32 %v118, %v130
    %v142 = vadd.f32 %v119, %v130
    %v143 = vadd.f32 %v120, %v130
    %v144 = vadd.f32 %v121, %v130
    %v145 = vadd.f32 %v122, %v130
    %v146 = vadd.f32 %v123, %v130
    %v147 = vadd.f32 %v124, %v130
    %v148 = vmax.f32 %v132, 0.0
    %v149 = vmax.f32 %v133, 0.0
    %v150 = vmax.f32 %v134, 0.0
    %v151 = vmax.f32 %v135, 0.0
    %v152 = vmax.f32 %v136, 0.0
    %v153 = vmax.f32 %v137, 0.0
    %v154 = vmax.f32 %v138, 0.0
    %v155 = vmax.f32 %v139, 0.0
    %v156 = vmax.f32 %v140, 0.0
    %v157 = vmax.f32 %v141, 0.0
    %v158 = vmax.f32 %v142, 0.0
    %v159 = vmax.f32 %v143, 0.0
    %v160 = vmax.f32 %v144, 0.0
    %v161 = vmax.f32 %v145, 0.0
    %v162 = vmax.f32 %v146, 0.0
    %v163 = vmax.f32 %v147, 0.0
    %v164 = vld [vmem:[#allocation2] sm:$0xff]
    %v165 = vld [vmem:[#allocation2 + $0x8] sm:$0xff]
    %v166 = vld [vmem:[#allocation2 + $0x10] sm:$0xff]
    %v167 = vld [vmem:[#allocation2 + $0x18] sm:$0xff]
    %v168 = vld [vmem:[#allocation2 + $0x20] sm:$0xff]
    %v169 = vld [vmem:[#allocation2 + $0x28] sm:$0xff]
    %v170 = vld [vmem:[#allocation2 + $0x30] sm:$0xff]
    %v171 = vld [vmem:[#allocation2 + $0x38] sm:$0xff]
    %v172 = vld [vmem:[#allocation2 + $0x40] sm:$0xff]
    %v173 = vld [vmem:[#allocation2 + $0x48] sm:$0xff]
    %v174 = vld [vmem:[#allocation2 + $0x50] sm:$0xff]
    %v175 = vld [vmem:[#allocation2 + $0x58] sm:$0xff]
    %v176 = vld [vmem:[#allocation2 + $0x60] sm:$0xff]
    %v177 = vld [vmem:[#allocation2 + $0x68] sm:$0xff]
    %v178 = vld [vmem:[#allocation2 + $0x70] sm:$0xff]
    %v179 = vld [vmem:[#allocation2 + $0x78] sm:$0xff]
    %v180 = vld [vmem:[#allocation3] sm:$0xf]
    %v181 = vld [vmem:[#allocation3 + $0x4] sm:$0xf]
    %v182 = vld [vmem:[#allocation3 + $0x8] sm:$0xf]
    %v183 = vld [vmem:[#allocation3 + $0xc] sm:$0xf]
    %v184 = vld [vmem:[#allocation3 + $0x10] sm:$0xf]
    %v185 = vld [vmem:[#allocation3 + $0x14] sm:$0xf]
    %v186 = vld [vmem:[#allocation3 + $0x18] sm:$0xf]
    %v187 = vld [vmem:[#allocation3 + $0x1c] sm:$0xf]
    %v188 = vld [vmem:[#allocation3 + $0x20] sm:$0xf]
    %v189 = vld [vmem:[#allocation3 + $0x24] sm:$0xf]
    %v190 = vld [vmem:[#allocation3 + $0x28] sm:$0xf]
    %v191 = vld [vmem:[#allocation3 + $0x2c] sm:$0xf]
    %v192 = vld [vmem:[#allocation3 + $0x30] sm:$0xf]
    %v193 = vld [vmem:[#allocation3 + $0x34] sm:$0xf]
    %v194 = vld [vmem:[#allocation3 + $0x38] sm:$0xf]
    %v195 = vld [vmem:[#allocation3 + $0x3c] sm:$0xf]
    %v196 = vpack.c.bf16 %v149, %v148
    %v197 = vpack.c.bf16 %v151, %v150
    %v198 = vpack.c.bf16 %v153, %v152
    %v199 = vpack.c.bf16 %v155, %v154
    %v200 = vpack.c.bf16 %v157, %v156
    %v201 = vpack.c.bf16 %v159, %v158
    %v202 = vpack.c.bf16 %v161, %v160
    %v203 = vpack.c.bf16 %v163, %v162
    %v220 = vunpack.c.l.b16 %v180
    %v221 = vunpack.c.l.b16 %v181
    %v222 = vunpack.c.l.b16 %v182
    %v223 = vunpack.c.l.b16 %v183
    %v224 = vunpack.c.l.b16 %v184
    %v225 = vunpack.c.l.b16 %v185
    %v226 = vunpack.c.l.b16 %v186
    %v227 = vunpack.c.l.b16 %v187
    %v228 = vunpack.c.l.b16 %v188
    %v229 = vunpack.c.l.b16 %v189
    %v230 = vunpack.c.l.b16 %v190
    %v231 = vunpack.c.l.b16 %v191
    %v232 = vunpack.c.l.b16 %v192
    %v233 = vunpack.c.l.b16 %v193
    %v234 = vunpack.c.l.b16 %v194
    %v235 = vunpack.c.l.b16 %v195
    %v236 = vpack.c.b16 %v221, %v220
    %v237 = vpack.c.b16 %v223, %v222
    %v238 = vpack.c.b16 %v225, %v224
    %v239 = vpack.c.b16 %v227, %v226
    %v240 = vpack.c.b16 %v229, %v228
    %v241 = vpack.c.b16 %v231, %v230
    %v242 = vpack.c.b16 %v233, %v232
    %v243 = vpack.c.b16 %v235, %v234
    %252 = vmatprep.subr.bf16.mxu0 0
    %253 = vmatpush1.bf16.msra.mxu0 %v196
    %254 = vmatprep.subr.bf16.mxu0 0
    %255 = vmatpush1.bf16.msra.mxu0 %v197
    %256 = vmatprep.subr.bf16.mxu0 0
    %257 = vmatpush1.bf16.msra.mxu0 %v198
    %258 = vmatprep.subr.bf16.mxu0 0
    %259 = vmatpush1.bf16.msra.mxu0 %v199
    %260 = vmatprep.subr.bf16.mxu0 0
    %261 = vmatpush1.bf16.msra.mxu0 %v200
    %262 = vmatprep.subr.bf16.mxu0 0
    %263 = vmatpush1.bf16.msra.mxu0 %v201
    %264 = vmatprep.subr.bf16.mxu0 0
    %265 = vmatpush1.bf16.msra.mxu0 %v202
    %266 = vmatprep.subr.bf16.mxu0 0
    %267 = vmatpush1.bf16.msra.mxu0 %v203
    %268 = vmatprep.subr.bf16.mxu0 0
    %269 = vmatpush1.bf16.msra.mxu0 0
    %270 = vmatprep.subr.bf16.mxu0 0
    %271 = vmatpush1.bf16.msra.mxu0 0
    %272 = vmatprep.subr.bf16.mxu0 0
    %273 = vmatpush1.bf16.msra.mxu0 0
    %274 = vmatprep.subr.bf16.mxu0 0
    %275 = vmatpush1.bf16.msra.mxu0 0
    %276 = vmatprep.subr.bf16.mxu0 0
    %277 = vmatpush1.bf16.msra.mxu0 0
    %278 = vmatprep.subr.bf16.mxu0 0
    %279 = vmatpush1.bf16.msra.mxu0 0
    %280 = vmatprep.subr.bf16.mxu0 0
    %281 = vmatpush1.bf16.msra.mxu0 0
    %282 = vmatprep.subr.bf16.mxu0 0
    %283 = vmatpush1.bf16.msra.mxu0 0
    %284 = vmatprep.mubr.bf16.mxu0 0
    %285 = vmatmul.mubr.bf16.gmra.mrb[0].mxu0 %v236
    %v286 = vpop.f32.mrb[0].mxu0
    %v287 = vadd.f32 0.0, %v286
    %v288 = vpop.f32.mrb[0].mxu0
    %v289 = vpop.f32.mrb[0].mxu0
    %v290 = vadd.f32 0.0, %v289
    %v291 = vpop.f32.mrb[0].mxu0
    %292 = vmatprep.mubr.bf16.mxu0 0
    %293 = vmatmul.mubr.bf16.gmra.mrb[0].mxu0 %v237
    %v294 = vpop.f32.mrb[0].mxu0
    %v295 = vadd.f32 0.0, %v294
    %v296 = vpop.f32.mrb[0].mxu0
    %v297 = vpop.f32.mrb[0].mxu0
    %v298 = vadd.f32 0.0, %v297
    %v299 = vpop.f32.mrb[0].mxu0
    %300 = vmatprep.mubr.bf16.mxu0 0
    %301 = vmatmul.mubr.bf16.gmra.mrb[0].mxu0 %v238
    %v302 = vpop.f32.mrb[0].mxu0
    %v303 = vadd.f32 0.0, %v302
    %v304 = vpop.f32.mrb[0].mxu0
    %v305 = vpop.f32.mrb[0].mxu0
    %v306 = vadd.f32 0.0, %v305
    %v307 = vpop.f32.mrb[0].mxu0
    %308 = vmatprep.mubr.bf16.mxu0 0
    %309 = vmatmul.mubr.bf16.gmra.mrb[0].mxu0 %v239
    %v310 = vpop.f32.mrb[0].mxu0
    %v311 = vadd.f32 0.0, %v310
    %v312 = vpop.f32.mrb[0].mxu0
    %v313 = vpop.f32.mrb[0].mxu0
    %v314 = vadd.f32 0.0, %v313
    %v315 = vpop.f32.mrb[0].mxu0
    %316 = vmatprep.mubr.bf16.mxu0 0
    %317 = vmatmul.mubr.bf16.gmra.mrb[0].mxu0 %v240
    %v318 = vpop.f32.mrb[0].mxu0
    %v319 = vadd.f32 0.0, %v318
    %v320 = vpop.f32.mrb[0].mxu0
    %v321 = vpop.f32.mrb[0].mxu0
    %v322 = vadd.f32 0.0, %v321
    %v323 = vpop.f32.mrb[0].mxu0
    %324 = vmatprep.mubr.bf16.mxu0 0
    %325 = vmatmul.mubr.bf16.gmra.mrb[0].mxu0 %v241
    %v326 = vpop.f32.mrb[0].mxu0
    %v327 = vadd.f32 0.0, %v326
    %v328 = vpop.f32.mrb[0].mxu0
    %v329 = vpop.f32.mrb[0].mxu0
    %v330 = vadd.f32 0.0, %v329
    %v331 = vpop.f32.mrb[0].mxu0
    %332 = vmatprep.mubr.bf16.mxu0 0
    %333 = vmatmul.mubr.bf16.gmra.mrb[0].mxu0 %v242
    %v334 = vpop.f32.mrb[0].mxu0
    %v335 = vadd.f32 0.0, %v334
    %v336 = vpop.f32.mrb[0].mxu0
    %v337 = vpop.f32.mrb[0].mxu0
    %v338 = vadd.f32 0.0, %v337
    %v339 = vpop.f32.mrb[0].mxu0
    %340 = vmatprep.mubr.bf16.mxu0 0
    %341 = vmatmul.mubr.bf16.gmra.mrb[0].mxu0 %v243
    %v342 = vpop.f32.mrb[0].mxu0
    %v343 = vadd.f32 0.0, %v342
    %v344 = vpop.f32.mrb[0].mxu0
    %v345 = vpop.f32.mrb[0].mxu0
    %v346 = vadd.f32 0.0, %v345
    %v347 = vpop.f32.mrb[0].mxu0
    %348 = vdwg.mxu0
    %v349 = vadd.f32 %v164, %v287
    %v350 = vadd.f32 %v165, %v290
    %v351 = vadd.f32 %v166, %v295
    %v352 = vadd.f32 %v167, %v298
    %v353 = vadd.f32 %v168, %v303
    %v354 = vadd.f32 %v169, %v306
    %v355 = vadd.f32 %v170, %v311
    %v356 = vadd.f32 %v171, %v314
    %v357 = vadd.f32 %v172, %v319
    %v358 = vadd.f32 %v173, %v322
    %v359 = vadd.f32 %v174, %v327
    %v360 = vadd.f32 %v175, %v330
    %v361 = vadd.f32 %v176, %v335
    %v362 = vadd.f32 %v177, %v338
    %v363 = vadd.f32 %v178, %v343
    %v364 = vadd.f32 %v179, %v346
    %365 = vst [vmem:[#allocation2] sm:$0xff] %v349
    %366 = vst [vmem:[#allocation2 + $0x8] sm:$0xff] %v350
    %367 = vst [vmem:[#allocation2 + $0x10] sm:$0xff] %v351
    %368 = vst [vmem:[#allocation2 + $0x18] sm:$0xff] %v352
    %369 = vst [vmem:[#allocation2 + $0x20] sm:$0xff] %v353
    %370 = vst [vmem:[#allocation2 + $0x28] sm:$0xff] %v354
    %371 = vst [vmem:[#allocation2 + $0x30] sm:$0xff] %v355
    %372 = vst [vmem:[#allocation2 + $0x38] sm:$0xff] %v356
    %373 = vst [vmem:[#allocation2 + $0x40] sm:$0xff] %v357
    %374 = vst [vmem:[#allocation2 + $0x48] sm:$0xff] %v358
    %375 = vst [vmem:[#allocation2 + $0x50] sm:$0xff] %v359
    %376 = vst [vmem:[#allocation2 + $0x58] sm:$0xff] %v360
    %377 = vst [vmem:[#allocation2 + $0x60] sm:$0xff] %v361
    %378 = vst [vmem:[#allocation2 + $0x68] sm:$0xff] %v362
    %379 = vst [vmem:[#allocation2 + $0x70] sm:$0xff] %v363
    %380 = vst [vmem:[#allocation2 + $0x78] sm:$0xff] %v364
    // Predicated region
    $region42: #{tpu_custom_call.1} parent=1 // pred_check
      %p381 = pneg %p66
    $region43: #{tpu_custom_call.1} parent=1 // pred_check_branch
      %383 = sbr.rel (%p381) target = $region45
    $region44: #{tpu_custom_call.1} parent=1 // pred_region
      %v384 = vld [vmem:[#allocation2] sm:$0xff]
      %v385 = vld [vmem:[#allocation2 + $0x8] sm:$0xff]
      %v386 = vld [vmem:[#allocation2 + $0x10] sm:$0xff]
      %v387 = vld [vmem:[#allocation2 + $0x18] sm:$0xff]
      %v388 = vld [vmem:[#allocation2 + $0x20] sm:$0xff]
      %v389 = vld [vmem:[#allocation2 + $0x28] sm:$0xff]
      %v390 = vld [vmem:[#allocation2 + $0x30] sm:$0xff]
      %v391 = vld [vmem:[#allocation2 + $0x38] sm:$0xff]
      %v392 = vld [vmem:[#allocation2 + $0x40] sm:$0xff]
      %v393 = vld [vmem:[#allocation2 + $0x48] sm:$0xff]
      %v394 = vld [vmem:[#allocation2 + $0x50] sm:$0xff]
      %v395 = vld [vmem:[#allocation2 + $0x58] sm:$0xff]
      %v396 = vld [vmem:[#allocation2 + $0x60] sm:$0xff]
      %v397 = vld [vmem:[#allocation2 + $0x68] sm:$0xff]
      %v398 = vld [vmem:[#allocation2 + $0x70] sm:$0xff]
      %v399 = vld [vmem:[#allocation2 + $0x78] sm:$0xff]
      %v400 = vld [vmem:[#allocation8] sm:$0xff]
      %v401 = vld [vmem:[#allocation8 + $0x8] sm:$0xff]
      %v402 = vld [vmem:[#allocation8 + $0x10] sm:$0xff]
      %v403 = vld [vmem:[#allocation8 + $0x18] sm:$0xff]
      %v404 = vld [vmem:[#allocation8 + $0x20] sm:$0xff]
      %v405 = vld [vmem:[#allocation8 + $0x28] sm:$0xff]
      %v406 = vld [vmem:[#allocation8 + $0x30] sm:$0xff]
      %v407 = vld [vmem:[#allocation8 + $0x38] sm:$0xff]
      %v408 = vld [vmem:[#allocation8 + $0x40] sm:$0xff]
      %v409 = vld [vmem:[#allocation8 + $0x48] sm:$0xff]
      %v410 = vld [vmem:[#allocation8 + $0x50] sm:$0xff]
      %v411 = vld [vmem:[#allocation8 + $0x58] sm:$0xff]
      %v412 = vld [vmem:[#allocation8 + $0x60] sm:$0xff]
      %v413 = vld [vmem:[#allocation8 + $0x68] sm:$0xff]
      %v414 = vld [vmem:[#allocation8 + $0x70] sm:$0xff]
      %v415 = vld [vmem:[#allocation8 + $0x78] sm:$0xff]
      %v416 = vld [vmem:[%s5] sm:$0x1]
      %v418 = vlaneseq
      %v419 = vshrl.u32 %v418, 7
      %v420 = vsub.s32 0, %v419
      %v421 = vrot.slane %v416, %v420
      %423 = vmatprep.subr.mxu0 0.0
      %424 = vmatpush1.msra.mxu0 %v400
      %425 = vmatprep.subr.mxu0 0.0
      %426 = vmatpush1.msra.mxu0 %v401
      %427 = vmatprep.subr.mxu0 0.0
      %428 = vmatpush1.msra.mxu0 %v402
      %429 = vmatprep.subr.mxu0 0.0
      %430 = vmatpush1.msra.mxu0 %v403
      %431 = vmatprep.subr.mxu0 0.0
      %432 = vmatpush1.msra.mxu0 %v404
      %433 = vmatprep.subr.mxu0 0.0
      %434 = vmatpush1.msra.mxu0 %v405
      %435 = vmatprep.subr.mxu0 0.0
      %436 = vmatpush1.msra.mxu0 %v406
      %437 = vmatprep.subr.mxu0 0.0
      %438 = vmatpush1.msra.mxu0 %v407
      %439 = vmatprep.subr.mxu0 0.0
      %440 = vmatpush1.msra.mxu0 %v408
      %441 = vmatprep.subr.mxu0 0.0
      %442 = vmatpush1.msra.mxu0 %v409
      %443 = vmatprep.subr.mxu0 0.0
      %444 = vmatpush1.msra.mxu0 %v410
      %445 = vmatprep.subr.mxu0 0.0
      %446 = vmatpush1.msra.mxu0 %v411
      %447 = vmatprep.subr.mxu0 0.0
      %448 = vmatpush1.msra.mxu0 %v412
      %449 = vmatprep.subr.mxu0 0.0
      %450 = vmatpush1.msra.mxu0 %v413
      %451 = vmatprep.subr.mxu0 0.0
      %452 = vmatpush1.msra.mxu0 %v414
      %453 = vmatprep.subr.mxu0 0.0
      %454 = vmatpush1.msra.mxu0 %v415
      %455 = vmatprep.subr.mxu0 0.0
      %456 = vmatpush1.msra.mxu0 0.0
      %457 = vmatprep.subr.mxu0 0.0
      %458 = vmatpush1.msra.mxu0 0.0
      %459 = vmatprep.subr.mxu0 0.0
      %460 = vmatpush1.msra.mxu0 0.0
      %461 = vmatprep.subr.mxu0 0.0
      %462 = vmatpush1.msra.mxu0 0.0
      %463 = vmatprep.subr.mxu0 0.0
      %464 = vmatpush1.msra.mxu0 0.0
      %465 = vmatprep.subr.mxu0 0.0
      %466 = vmatpush1.msra.mxu0 0.0
      %467 = vmatprep.subr.mxu0 0.0
      %468 = vmatpush1.msra.mxu0 0.0
      %469 = vmatprep.subr.mxu0 0.0
      %470 = vmatpush1.msra.mxu0 0.0
      %471 = vmatprep.subr.mxu0 0.0
      %472 = vmatpush1.msra.mxu0 0.0
      %473 = vmatprep.subr.mxu0 0.0
      %474 = vmatpush1.msra.mxu0 0.0
      %475 = vmatprep.subr.mxu0 0.0
      %476 = vmatpush1.msra.mxu0 0.0
      %477 = vmatprep.subr.mxu0 0.0
      %478 = vmatpush1.msra.mxu0 0.0
      %479 = vmatprep.subr.mxu0 0.0
      %480 = vmatpush1.msra.mxu0 0.0
      %481 = vmatprep.subr.mxu0 0.0
      %482 = vmatpush1.msra.mxu0 0.0
      %483 = vmatprep.subr.mxu0 0.0
      %484 = vmatpush1.msra.mxu0 0.0
      %485 = vmatprep.subr.mxu0 0.0
      %486 = vmatpush1.msra.mxu0 0.0
      %487 = vmatprep.mubr.f32.mxu0 0.0
      %488 = vmatmul.mubr.f32.gmra.mrb[0].mxu0 %v384
      %v489 = vpop.f32.mrb[0].mxu0
      %v490 = vadd.f32 %v421, %v489
      %v491 = vpop.f32.mrb[0].mxu0
      %492 = vmatprep.mubr.f32.mxu0 0.0
      %493 = vmatmul.mubr.f32.gmra.mrb[0].mxu0 %v385
      %v494 = vpop.f32.mrb[0].mxu0
      %v495 = vadd.f32 %v421, %v494
      %v496 = vpop.f32.mrb[0].mxu0
      %497 = vmatprep.mubr.f32.mxu0 0.0
      %498 = vmatmul.mubr.f32.gmra.mrb[0].mxu0 %v386
      %v499 = vpop.f32.mrb[0].mxu0
      %v500 = vadd.f32 %v421, %v499
      %v501 = vpop.f32.mrb[0].mxu0
      %502 = vmatprep.mubr.f32.mxu0 0.0
      %503 = vmatmul.mubr.f32.gmra.mrb[0].mxu0 %v387
      %v504 = vpop.f32.mrb[0].mxu0
      %v505 = vadd.f32 %v421, %v504
      %v506 = vpop.f32.mrb[0].mxu0
      %507 = vmatprep.mubr.f32.mxu0 0.0
      %508 = vmatmul.mubr.f32.gmra.mrb[0].mxu0 %v388
      %v509 = vpop.f32.mrb[0].mxu0
      %v510 = vadd.f32 %v421, %v509
      %v511 = vpop.f32.mrb[0].mxu0
      %512 = vmatprep.mubr.f32.mxu0 0.0
      %513 = vmatmul.mubr.f32.gmra.mrb[0].mxu0 %v389
      %v514 = vpop.f32.mrb[0].mxu0
      %v515 = vadd.f32 %v421, %v514
      %v516 = vpop.f32.mrb[0].mxu0
      %517 = vmatprep.mubr.f32.mxu0 0.0
      %518 = vmatmul.mubr.f32.gmra.mrb[0].mxu0 %v390
      %v519 = vpop.f32.mrb[0].mxu0
      %v520 = vadd.f32 %v421, %v519
      %v521 = vpop.f32.mrb[0].mxu0
      %522 = vmatprep.mubr.f32.mxu0 0.0
      %523 = vmatmul.mubr.f32.gmra.mrb[0].mxu0 %v391
      %v524 = vpop.f32.mrb[0].mxu0
      %v525 = vadd.f32 %v421, %v524
      %v526 = vpop.f32.mrb[0].mxu0
      %527 = vmatprep.mubr.f32.mxu0 0.0
      %528 = vmatmul.mubr.f32.gmra.mrb[0].mxu0 %v392
      %v529 = vpop.f32.mrb[0].mxu0
      %v530 = vadd.f32 %v421, %v529
      %v531 = vpop.f32.mrb[0].mxu0
      %532 = vmatprep.mubr.f32.mxu0 0.0
      %533 = vmatmul.mubr.f32.gmra.mrb[0].mxu0 %v393
      %v534 = vpop.f32.mrb[0].mxu0
      %v535 = vadd.f32 %v421, %v534
      %v536 = vpop.f32.mrb[0].mxu0
      %537 = vmatprep.mubr.f32.mxu0 0.0
      %538 = vmatmul.mubr.f32.gmra.mrb[0].mxu0 %v394
      %v539 = vpop.f32.mrb[0].mxu0
      %v540 = vadd.f32 %v421, %v539
      %v541 = vpop.f32.mrb[0].mxu0
      %542 = vmatprep.mubr.f32.mxu0 0.0
      %543 = vmatmul.mubr.f32.gmra.mrb[0].mxu0 %v395
      %v544 = vpop.f32.mrb[0].mxu0
      %v545 = vadd.f32 %v421, %v544
      %v546 = vpop.f32.mrb[0].mxu0
      %547 = vmatprep.mubr.f32.mxu0 0.0
      %548 = vmatmul.mubr.f32.gmra.mrb[0].mxu0 %v396
      %v549 = vpop.f32.mrb[0].mxu0
      %v550 = vadd.f32 %v421, %v549
      %v551 = vpop.f32.mrb[0].mxu0
      %552 = vmatprep.mubr.f32.mxu0 0.0
      %553 = vmatmul.mubr.f32.gmra.mrb[0].mxu0 %v397
      %v554 = vpop.f32.mrb[0].mxu0
      %v555 = vadd.f32 %v421, %v554
      %v556 = vpop.f32.mrb[0].mxu0
      %557 = vmatprep.mubr.f32.mxu0 0.0
      %558 = vmatmul.mubr.f32.gmra.mrb[0].mxu0 %v398
      %v559 = vpop.f32.mrb[0].mxu0
      %v560 = vadd.f32 %v421, %v559
      %v561 = vpop.f32.mrb[0].mxu0
      %562 = vmatprep.mubr.f32.mxu0 0.0
      %563 = vmatmul.mubr.f32.gmra.mrb[0].mxu0 %v399
      %v564 = vpop.f32.mrb[0].mxu0
      %v565 = vadd.f32 %v421, %v564
      %v566 = vpop.f32.mrb[0].mxu0
      %567 = vdwg.mxu0
      %568 = vst [vmem:[#allocation9] sm:$0xff] %v490
      %569 = vst [vmem:[#allocation9 + $0x8] sm:$0xff] %v495
      %570 = vst [vmem:[#allocation9 + $0x10] sm:$0xff] %v500
      %571 = vst [vmem:[#allocation9 + $0x18] sm:$0xff] %v505
      %572 = vst [vmem:[#allocation9 + $0x20] sm:$0xff] %v510
      %573 = vst [vmem:[#allocation9 + $0x28] sm:$0xff] %v515
      %574 = vst [vmem:[#allocation9 + $0x30] sm:$0xff] %v520
      %575 = vst [vmem:[#allocation9 + $0x38] sm:$0xff] %v525
      %576 = vst [vmem:[#allocation9 + $0x40] sm:$0xff] %v530
      %577 = vst [vmem:[#allocation9 + $0x48] sm:$0xff] %v535
      %578 = vst [vmem:[#allocation9 + $0x50] sm:$0xff] %v540
      %579 = vst [vmem:[#allocation9 + $0x58] sm:$0xff] %v545
      %580 = vst [vmem:[#allocation9 + $0x60] sm:$0xff] %v550
      %581 = vst [vmem:[#allocation9 + $0x68] sm:$0xff] %v555
      %582 = vst [vmem:[#allocation9 + $0x70] sm:$0xff] %v560
      %583 = vst [vmem:[#allocation9 + $0x78] sm:$0xff] %v565
    $region45: #{tpu_custom_call.1} parent=1 // pred_fallthru
      _
    // Predicated region
    $region46: #{tpu_custom_call.1} parent=1 // pred_check
      _
    $region47: #{tpu_custom_call.1} parent=1 // pred_check_branch
      %585 = sbr.rel (0) target = $region49
    $region48: #{tpu_custom_call.1} parent=1 // pred_region
      %s587 = ssub.s32 2048, 2048
      %588 = vsyncadd [#allocation5], %s587
      %s589 = sshll.u32 [#allocation9], 4
      %s590 = int_to_ptr.vmem [resolvable:$true] %s589
      %595 = dma.vmem_to_hbm [thread:$0]  %s590, 2048, %s6, [#allocation5], 128, 128, 8
    $region49: #{tpu_custom_call.1} parent=1 // pred_fallthru
      _
    // Predicated region
    $region50: #{tpu_custom_call.1} parent=1 // pred_check
      _
    $region51: #{tpu_custom_call.1} parent=1 // pred_check_branch
      %597 = sbr.rel (0) target = $region53
    $region52: #{tpu_custom_call.1} parent=1 // pred_region
      %598 = dma.done [#allocation5], 2048
    $region53: #{tpu_custom_call.1} parent=1 // pred_fallthru
      _
    %599 = vsyncpa [#allocation4], 1
    %600 = vsyncpa [#allocation7], 1
    %601 = vsyncpa [#allocation5], 1

</llo_original>
